<compile_context>
chip_gen: v6e
topology: v6e:2x2x1
jax: 0.10.0
libtpu: 0.0.40
codegen_flags: <defaults>
</compile_context>

<pallas_src>
import numpy as np
import jax
import jax.numpy as jnp
from jax import lax
from jax.experimental import pallas as pl
from jax.experimental.pallas import tpu as pltpu

# ---- game constants (module-level globals referenced by the PyTorch code) ----
DECK_SIZE = 48
NUM_SUITS = 8
NUM_IN_SUIT = DECK_SIZE // NUM_SUITS          # 6
N_PLAYERS = 6
HALF = N_PLAYERS // 2                         # 3
EMBED = 10
HIDDEN_DIMS = 2 * EMBED + 2                   # 22
DECLARE_THRESHOLD = 0.9

# ---- packed layouts -----------------------------------------------------------
GATE_STRIDE = 32                               # gate k occupies lanes [k*32, k*32+E)
LSTM_W_COLS = 128                              # all 4 gates in one 128-lane group
ACT_COLS = 3 * EMBED + 2                       # 32 = [3 embeddings | success | 1.0(bias)]
HEAD_COLS = 128                                # fused head lane width
OUT_ROWS = 8                                   # one full (8,128) f32 output tile
HIST_BUCKET = 16                               # history rows padded to a multiple of this
MAX_HAND = 12                                  # hand padded to this many cards

# fused-head lane offsets: [cards | declare | ask | declaring_player | suit | zeros]
_CARDS0 = 0
_DECL0 = DECK_SIZE                             # 48
_ASK0 = _DECL0 + 1                             # 49
_DP0 = _ASK0 + HALF                            # 52
_SUIT0 = _DP0 + HALF                           # 55

# weight-slab row offsets (16-aligned sections for clean bf16 tiles)
_W_IH0 = 0                                     # rows  0..30  : W_ih^T (gate-spread)
_W_BIAS = 3 * EMBED + 1                        # row   31     : b_ih + b_hh (gate-spread)
_W_HH0 = 32                                    # rows 32..41  : W_hh^T (gate-spread)
_W_HIST0 = 48                                  # rows 48..57  : head W for history features
_W_OWN0 = 64                                   # rows 64..73  : head W for own_cards
                                               # rows 74,75   : W_score, W_i ; row 76 : head bias
W_SLAB_ROWS = 80


def cards_of_suit(s):
    return list(range(s * NUM_IN_SUIT, (s + 1) * NUM_IN_SUIT))


def get_suits_hand(hand):
    return sorted({c // NUM_IN_SUIT for c in hand})


def suit_splice(s):
    return slice(s * NUM_IN_SUIT, (s + 1) * NUM_IN_SUIT)


# ----------------------------- Pallas kernel ----------------------------------
def _recurrent_player_kernel(t_ref, acts_ref, w_ref, out_ref, xg_ref):
    """t:    (1,)  int32 SMEM  -- true history length (<= padded rows)
       acts: (Tp+1, 32) bf16   -- rows 0:Tp = [asking|asked|card|success|1] (padding zeros),
                                  last row = [own(10)|score|i|1|0...]
       w:    (80, 128) bf16    -- packed weight slab (see row-offset constants)
       out:  (8, 128)  f32     -- row 0 fused heads (sigmoid on declare lane),
                                  rows 1:4 min-subtracted ask_matrix (lanes 0:48), rest 0
       xg:   (Tp+1, 128) f32 scratch -- input-to-gate projection (+bias) for all timesteps
    """
    E = EMBED
    GS = GATE_STRIDE
    last = acts_ref.shape[0] - 1               # static: padded history rows
    t_len = t_ref[0]                           # dynamic: true history length

    w_ih = w_ref[_W_IH0:_W_IH0 + ACT_COLS, :]          # (32, 128) bf16 (bias row included)
    w_hh = w_ref[_W_HH0:_W_HH0 + E, :]                 # (10, 128) bf16 -- hoisted, 1 vreg
    w_hist = w_ref[_W_HIST0:_W_HIST0 + E, :]           # (10, 128) bf16
    w_own = w_ref[_W_OWN0:_W_OWN0 + E + 3, :]          # (13, 128) bf16

    # Input-to-gate projection + bias for ALL (padded) timesteps at once; the trailing
    # ones-column of `acts` multiplies the bias row.  Padded rows produce garbage that the
    # recurrence never reads.
    xg_ref[...] = jnp.dot(acts_ref[...], w_ih, preferred_element_type=jnp.float32)

    # Loop-invariant part of the fused heads, hoisted before the serial recurrence:
    # const = own_cards @ W_own + score * W_score + i * W_i + b_head.
    own_si = acts_ref[last:last + 1, 0:E + 3]          # (1, 13) = [own | score | i | 1]
    const = jnp.dot(own_si, w_own, preferred_element_type=jnp.float32)   # (1, 128)

    # LSTM recurrence (PyTorch gate order i, f, g, o), all gates in ONE 128-lane vreg:
    # one bf16 MXU dot + one sigmoid sweep per step; tanh(z_g) = 2*sigmoid(2 z_g) - 1
    # (g-gate pre-scaled by 2 in the packed weights).
    def step(t, carry):
        h, c = carry
        g = xg_ref[pl.ds(t, 1), :] + jnp.dot(h.astype(jnp.bfloat16), w_hh,
                                             preferred_element_type=jnp.float32)
        s = jax.nn.sigmoid(g)                          # (1, 128) -- single EUP pass
        i_g = s[:, 0:E]
        f_g = s[:, GS:GS + E]
        g_g = 2.0 * s[:, 2 * GS:2 * GS + E] - 1.0
        o_g = s[:, 3 * GS:3 * GS + E]
        c = f_g * c + i_g * g_g
        h = o_g * jnp.tanh(c)
        return h, c

    h0 = jnp.zeros((1, E), jnp.float32)
    c0 = jnp.zeros((1, E), jnp.float32)
    h, _ = lax.fori_loop(0, t_len, step, (h0, c0))     # dynamic trip count -> no recompiles

    # Fused heads: one (1,10)x(10,128) bf16 matmul; lanes = [cards|decl|ask|dp|suit|0...].
    head_lin = jnp.dot(h.astype(jnp.bfloat16), w_hist,
                       preferred_element_type=jnp.float32) + const

    lane1 = lax.broadcasted_iota(jnp.int32, (1, HEAD_COLS), 1)
    head_out = jnp.where(lane1 == _DECL0, jax.nn.sigmoid(head_lin), head_lin)

    # ask_matrix = player_pred^T @ cards_pred (rank-1 outer), minus its min over the
    # 48 valid card lanes; padded lanes zeroed.
    ask_pred = head_lin[:, _ASK0:_ASK0 + HALF]          # (1, 3)
    outer = lax.dot_general(ask_pred, head_lin,
                            dimension_numbers=(((0,), (0,)), ((), ())),
                            preferred_element_type=jnp.float32)   # (3, 128)
    lane3 = lax.broadcasted_iota(jnp.int32, (HALF, HEAD_COLS), 1)
    valid = lane3 < DECK_SIZE
    mn = jnp.min(jnp.where(valid, outer, jnp.inf))
    ask_mat = jnp.where(valid, outer - mn, 0.0)

    # Single full-tile (8,128) store: no masked partial-sublane vst.
    pad_rows = jnp.zeros((OUT_ROWS - 1 - HALF, HEAD_COLS), jnp.float32)
    out_ref[...] = jnp.concatenate([head_out, ask_mat, pad_rows], axis=0)


def _heads_pallas(t_len, acts, w_slab):
    rows = acts.shape[0]
    vmem = pl.BlockSpec(memory_space=pltpu.MemorySpace.VMEM)
    smem = pl.BlockSpec(memory_space=pltpu.MemorySpace.SMEM)
    return pl.pallas_call(
        _recurrent_player_kernel,
        out_shape=jax.ShapeDtypeStruct((OUT_ROWS, HEAD_COLS), jnp.float32),
        in_specs=[smem, vmem, vmem],
        out_specs=vmem,
        scratch_shapes=[pltpu.VMEM((rows, LSTM_W_COLS), jnp.float32)],
    )(t_len, acts, w_slab)


# ------------------------------ parameters ------------------------------------
def pack_params(p):
    """Pack logical (PyTorch-layout-equivalent) params into ONE bf16 (80,128) slab."""
    E = EMBED

    def spread_gates(wm):
        wm = np.asarray(wm, np.float32)
        out = np.zeros((wm.shape[0], LSTM_W_COLS), np.float32)
        for k in range(4):                     # gate order i, f, g, o
            blk = wm[:, k * E:(k + 1) * E].copy()
            if k == 2:                         # pre-scale g gate: tanh(z) = 2*sigmoid(2z) - 1
                blk = 2.0 * blk
            out[:, k * GATE_STRIDE:k * GATE_STRIDE + E] = blk
        return out

    W = np.zeros((HIDDEN_DIMS, HEAD_COLS), np.float32)
    bh = np.zeros((HEAD_COLS,), np.float32)
    W[:, _CARDS0:_CARDS0 + DECK_SIZE] = np.asarray(p["w_cards"]); bh[_CARDS0:_CARDS0 + DECK_SIZE] = np.asarray(p["b_cards"])[0]
    W[:, _DECL0:_DECL0 + 1] = np.asarray(p["w_decl"]);            bh[_DECL0] = np.asarray(p["b_decl"])[0, 0]
    W[:, _ASK0:_ASK0 + HALF] = np.asarray(p["w_ask"]);            bh[_ASK0:_ASK0 + HALF] = np.asarray(p["b_ask"])[0]
    W[:, _DP0:_DP0 + HALF] = np.asarray(p["w_dp"]);               bh[_DP0:_DP0 + HALF] = np.asarray(p["b_dp"])[0]
    W[:, _SUIT0:_SUIT0 + NUM_SUITS] = np.asarray(p["w_suit"]);    bh[_SUIT0:_SUIT0 + NUM_SUITS] = np.asarray(p["b_suit"])[0]

    slab = np.zeros((W_SLAB_ROWS, HEAD_COLS), np.float32)
    slab[_W_IH0:_W_IH0 + 3 * E + 1] = spread_gates(p["w_ih_T"])
    slab[_W_BIAS] = spread_gates(p["b_lstm"])[0]
    slab[_W_HH0:_W_HH0 + E] = spread_gates(p["w_hh_T"])
    slab[_W_HIST0:_W_HIST0 + E] = W[E:2 * E]           # head W applied to history features
    slab[_W_OWN0:_W_OWN0 + E] = W[0:E]                 # head W applied to own_cards
    slab[_W_OWN0 + E] = W[2 * E]                       # W_score
    slab[_W_OWN0 + E + 1] = W[2 * E + 1]               # W_i
    slab[_W_OWN0 + E + 2] = bh                         # fused head bias
    return jnp.asarray(slab, jnp.bfloat16)


def init_params(key):
    E = EMBED
    keys = jax.random.split(key, 15)

    def w(k, shape, scale=0.1):
        v = scale * jax.random.normal(k, shape, jnp.float32)
        # keep logical params bf16-representable so the packed bf16 slab is lossless
        return v.astype(jnp.bfloat16).astype(jnp.float32)

    p = {}
    p["cards_embedding"] = w(keys[0], (DECK_SIZE, E))
    p["players_embedding"] = w(keys[1], (N_PLAYERS, E))
    # LSTM(3E+1 -> E), stored transposed for row-vector matmuls; gate order i,f,g,o.
    p["w_ih_T"] = w(keys[2], (3 * E + 1, 4 * E))
    p["w_hh_T"] = w(keys[3], (E, 4 * E))
    p["b_lstm"] = w(keys[4], (1, 4 * E))       # b_ih + b_hh folded together
    # Linear heads, stored as (in_features, out_features).
    p["w_cards"] = w(keys[5], (HIDDEN_DIMS, DECK_SIZE));  p["b_cards"] = w(keys[6], (1, DECK_SIZE))
    p["w_decl"] = w(keys[7], (HIDDEN_DIMS, 1));           p["b_decl"] = w(keys[8], (1, 1))
    p["w_ask"] = w(keys[9], (HIDDEN_DIMS, HALF));         p["b_ask"] = w(keys[10], (1, HALF))
    p["w_dp"] = w(keys[11], (HIDDEN_DIMS, HALF));         p["b_dp"] = w(keys[12], (1, HALF))
    p["w_suit"] = w(keys[13], (HIDDEN_DIMS, NUM_SUITS));  p["b_suit"] = w(keys[14], (1, NUM_SUITS))
    p["w_packed"] = pack_params(p)
    return p


# ------------------------------ forward glue -----------------------------------
def _bucket(t):
    return max(HIST_BUCKET, -(-t // HIST_BUCKET) * HIST_BUCKET)


@jax.jit
def _forward_jit(w_slab, cards_emb, players_emb, hist_p, t_len, cards_p, card_mask,
                 score, player_i):
    """Embedding gathers + activation packing + Pallas kernel in ONE XLA dispatch.
    All shapes are bucket-padded, so a new history length / hand size does not retrace."""
    E = EMBED
    T_pad = hist_p.shape[0]
    own = jnp.sum(jnp.take(cards_emb, cards_p, axis=0) * card_mask[:, None], axis=0)  # (E,)
    sc_i_one = jnp.stack([score, player_i, jnp.ones((), jnp.float32)])
    tail = jnp.zeros((ACT_COLS - (E + 3),), jnp.float32)
    last = jnp.concatenate([own, sc_i_one, tail])[None, :]               # (1, 32)

    asking = jnp.take(players_emb, hist_p[:, 0], axis=0)
    asked = jnp.take(players_emb, hist_p[:, 1], axis=0)
    acard = jnp.take(cards_emb, hist_p[:, 2], axis=0)
    succ = hist_p[:, 3:4].astype(jnp.float32)
    ones = jnp.ones((T_pad, 1), jnp.float32)
    hist_rows = jnp.concatenate([asking, asked, acard, succ, ones], axis=1)   # (T_pad, 32)

    acts = jnp.concatenate([hist_rows, last], axis=0).astype(jnp.bfloat16)    # (T_pad+1, 32)
    return _heads_pallas(t_len, acts, w_slab)


def recurrent_player_forward(params, i, score, history, cards):
    hist = np.asarray(history, np.int64).reshape((-1, 4)).astype(np.int32)
    cards_np = np.asarray(cards, np.int64).reshape((-1,)).astype(np.int32)
    T = hist.shape[0]
    T_pad = _bucket(T)
    hist_p = np.zeros((T_pad, 4), np.int32)
    hist_p[:T] = hist
    n = cards_np.shape[0]
    assert n <= MAX_HAND, "hand larger than MAX_HAND"
    cards_p = np.zeros((MAX_HAND,), np.int32)
    cards_p[:n] = cards_np
    mask = np.zeros((MAX_HAND,), np.float32)
    mask[:n] = 1.0
    return _forward_jit(params["w_packed"],
                        params["cards_embedding"], params["players_embedding"],
                        jnp.asarray(hist_p), jnp.asarray(np.array([T], np.int32)),
                        jnp.asarray(cards_p), jnp.asarray(mask),
                        jnp.asarray(float(score), jnp.float32),
                        jnp.asarray(float(i), jnp.float32))


def unpack_outputs(packed):
    out = np.asarray(packed)
    row = out[0]
    declare = float(row[_DECL0])
    cards_pred = row[_CARDS0:_CARDS0 + DECK_SIZE]
    ask_pred = row[_ASK0:_ASK0 + HALF]
    dp_pred = row[_DP0:_DP0 + HALF]
    suit_pred = row[_SUIT0:_SUIT0 + NUM_SUITS]
    ask_matrix = out[1:1 + HALF, 0:DECK_SIZE].copy()   # already min-subtracted in kernel
    return declare, cards_pred, ask_pred, dp_pred, suit_pred, ask_matrix


def postprocess(packed_out, i, cards, declared_suits, declare_threshold=DECLARE_THRESHOLD):
    """Host-side game logic mirroring the PyTorch forward's branch / masking."""
    # TODO(synk): Python-level set/dict construction and dynamic index masking have no clean
    # Pallas equivalent; kept on host with numpy.
    declare_score, cards_pred, _ask_pred, dp_pred, suit_pred, ask_matrix = unpack_outputs(packed_out)
    cards_np = np.asarray(cards, dtype=np.int64)
    i = int(i)

    if declare_score < declare_threshold and cards_np.shape[0] != 0:
        hand = [int(c) for c in cards_np]
        allowable = set()
        for s in get_suits_hand(hand):
            allowable |= set(cards_of_suit(s))
        not_allowable = np.asarray(sorted(set(range(DECK_SIZE)) - allowable), dtype=np.int64)
        ask_matrix[:, np.asarray(hand, dtype=np.int64)] = -1
        if not_allowable.size:
            ask_matrix[:, not_allowable] = -1
        max_val = ask_matrix.max()
        ask = np.argwhere(ask_matrix == max_val).squeeze().tolist()
        if i < HALF:
            ask[0] += HALF
        return declare_score, ask, float(max_val)
    else:
        sp = suit_pred - suit_pred.min()
        ds = np.asarray(declared_suits, dtype=np.int64)
        if ds.size:
            sp[ds] = -1
        suit = int(np.argmax(sp))
        # NOTE: bound mirrors the PyTorch reference verbatim (`<=` on both ends).
        card_filter = np.asarray(
            [int(c % NUM_IN_SUIT) for c in cards_np
             if suit * NUM_IN_SUIT <= c <= (suit + 1) * NUM_IN_SUIT],
            dtype=np.int64)
        declare_matrix = np.outer(dp_pred, cards_pred[suit_splice(suit)])
        player_mod = i % HALF
        declare_matrix[player_mod, card_filter] = 1
        for p_other in [p for p in range(HALF) if p != player_mod]:
            declare_matrix[p_other, card_filter] = -1
        owners = np.argmax(declare_matrix, axis=0)
        if i >= HALF:
            owners = owners + HALF
        declare_dict = {card: int(owner) for card, owner in
                        zip(range(suit * NUM_IN_SUIT, (suit + 1) * NUM_IN_SUIT), owners)}
        return declare_score, declare_dict, float(sp.max())


# ------------------------- pure-JAX reference (for checking) --------------------
def reference_forward(params, i, score, history, cards):
    E = EMBED
    history = jnp.asarray(np.asarray(history, np.int64).reshape((-1, 4)), jnp.int32)
    cards = jnp.asarray(np.asarray(cards, np.int64).reshape((-1,)), jnp.int32)
    if cards.shape[0] == 0:
        own = jnp.zeros((E,), jnp.float32)
    else:
        own = jnp.take(params["cards_embedding"], cards, axis=0).sum(axis=0)
    T = history.shape[0]
    if T == 0:
        h = jnp.zeros((E,), jnp.float32)
    else:
        asking = jnp.take(params["players_embedding"], history[:, 0], axis=0)
        asked = jnp.take(params["players_embedding"], history[:, 1], axis=0)
        acard = jnp.take(params["cards_embedding"], history[:, 2], axis=0)
        succ = history[:, 3:4].astype(jnp.float32)
        x = jnp.concatenate([asking, asked, acard, succ], axis=1)

        def step(carry, xt):
            h, c = carry
            g = xt @ params["w_ih_T"] + h @ params["w_hh_T"] + params["b_lstm"][0]
            i_g = jax.nn.sigmoid(g[0:E]); f_g = jax.nn.sigmoid(g[E:2 * E])
            g_g = jnp.tanh(g[2 * E:3 * E]); o_g = jax.nn.sigmoid(g[3 * E:4 * E])
            c = f_g * c + i_g * g_g
            h = o_g * jnp.tanh(c)
            return (h, c), None

        (h, _), _ = lax.scan(step, (jnp.zeros((E,), jnp.float32), jnp.zeros((E,), jnp.float32)), x)
    final = jnp.concatenate([own, h, jnp.asarray([float(score), float(i)], jnp.float32)])

    def head(wk, bk):
        return final @ params[wk] + params[bk][0]

    cards_pred = head("w_cards", "b_cards")
    declare = jax.nn.sigmoid(head("w_decl", "b_decl"))[0]
    ask_pred = head("w_ask", "b_ask")
    dp_pred = head("w_dp", "b_dp")
    suit_pred = head("w_suit", "b_suit")
    ask_mat = jnp.outer(ask_pred, cards_pred)
    ask_mat = ask_mat - jnp.min(ask_mat)
    return declare, cards_pred, ask_pred, dp_pred, suit_pred, ask_mat


# --------------------------------- demo ----------------------------------------
if __name__ == "__main__":
    key = jax.random.PRNGKey(0)
    pkey, hkey = jax.random.split(key, 2)
    params = init_params(pkey)

    i = 1            # player index
    score = 3        # game score
    T = 8            # history length
    history = np.stack(
        [
            np.asarray(jax.random.randint(jax.random.fold_in(hkey, 0), (T,), 0, N_PLAYERS)),
            np.asarray(jax.random.randint(jax.random.fold_in(hkey, 1), (T,), 0, N_PLAYERS)),
            np.asarray(jax.random.randint(jax.random.fold_in(hkey, 2), (T,), 0, DECK_SIZE)),
            np.asarray(jax.random.randint(jax.random.fold_in(hkey, 3), (T,), 0, 2)),
        ],
        axis=1,
    ).astype(np.int32)                                      # (8, 4)
    cards = np.array([2, 7, 13, 21, 40], dtype=np.int32)    # hand (5 cards)
    declared_suits = np.array([5], dtype=np.int64)

    names = ["declare", "cards_pred", "ask_pred", "dp_pred", "suit_pred", "ask_matrix"]
    TOL = 1e-2  # bf16 weight/activation path vs f32 reference

    def check(hist, cds, tag):
        packed = jax.block_until_ready(recurrent_player_forward(params, i, score, hist, cds))
        got = unpack_outputs(packed)
        ref = [np.asarray(r, np.float32) for r in jax.block_until_ready(
            reference_forward(params, i, score, hist, cds))]
        for name, g, r in zip(names, got, ref):
            np.testing.assert_allclose(np.asarray(g, np.float32), r, rtol=TOL, atol=TOL,
                                       err_msg=tag + ":" + name)
        return packed

    # main case (T=8, 5 cards)
    packed = check(history, cards, "T8")
    declare_score, pred, best = postprocess(packed, i, cards, declared_suits)
    assert np.isfinite(declare_score) and np.isfinite(best)

    # shorter history / smaller hand: same bucket -> reuses the compiled kernel (dynamic T)
    check(history[:3], cards[:4], "T3")

    # empty-history / empty-hand path (reference's zeros path)
    check(np.zeros((0, 4), np.int32), np.zeros((0,), np.int32), "T0")

    print("KERNEL_OK")
</pallas_src>

<mosaic_0001>
module attributes {stable_mosaic.version = 11 : i64} {
  func.func @_recurrent_player_kernel(%arg0: memref<1xi32, #tpu.memory_space<smem>>, %arg1: memref<17x32xbf16, #tpu.memory_space<vmem>>, %arg2: memref<80x128xbf16, #tpu.memory_space<vmem>>, %arg3: memref<8x128xf32, #tpu.memory_space<vmem>>, %arg4: memref<17x128xf32, #tpu.memory_space<vmem>>) attributes {dimension_semantics = [], scalar_prefetch = 0 : i64, scratch_operands = 1 : i64, tpu.core_type = #tpu.core_type<tc>} {
    %c0 = arith.constant 0 : index
    %0 = memref.load %arg0[%c0] : memref<1xi32, #tpu.memory_space<smem>>
    %c0_0 = arith.constant 0 : index
    %c0_1 = arith.constant 0 : index
    %1 = vector.load %arg2[%c0_0, %c0_1] : memref<80x128xbf16, #tpu.memory_space<vmem>>, vector<32x128xbf16>
    %c32 = arith.constant 32 : index
    %c0_2 = arith.constant 0 : index
    %2 = vector.load %arg2[%c32, %c0_2] : memref<80x128xbf16, #tpu.memory_space<vmem>>, vector<10x128xbf16>
    %c48 = arith.constant 48 : index
    %c0_3 = arith.constant 0 : index
    %3 = vector.load %arg2[%c48, %c0_3] : memref<80x128xbf16, #tpu.memory_space<vmem>>, vector<10x128xbf16>
    %c64 = arith.constant 64 : index
    %c0_4 = arith.constant 0 : index
    %4 = vector.load %arg2[%c64, %c0_4] : memref<80x128xbf16, #tpu.memory_space<vmem>>, vector<13x128xbf16>
    %c0_5 = arith.constant 0 : index
    %c0_6 = arith.constant 0 : index
    %5 = vector.load %arg1[%c0_5, %c0_6] : memref<17x32xbf16, #tpu.memory_space<vmem>>, vector<17x32xbf16>
    %cst = arith.constant dense<0.000000e+00> : vector<17x128xf32>
    %6 = tpu.matmul %5, %1, %cst {dimension_numbers = #tpu.dot_dimension_numbers<[1], [0], [0], [1], [0, 0, 1, 1], [], []>} : vector<17x32xbf16>, vector<32x128xbf16>, vector<17x128xf32> -> vector<17x128xf32>
    %c0_7 = arith.constant 0 : index
    %c0_8 = arith.constant 0 : index
    %7 = vector.load %arg4[%c0_7, %c0_8] : memref<17x128xf32, #tpu.memory_space<vmem>>, vector<17x128xf32>
    tpu.vector_store %arg4[%c0_7, %c0_8], %6 {strides = array<i32>} : memref<17x128xf32, #tpu.memory_space<vmem>>, vector<17x128xf32>,
    %c16 = arith.constant 16 : index
    %c0_9 = arith.constant 0 : index
    %8 = vector.load %arg1[%c16, %c0_9] : memref<17x32xbf16, #tpu.memory_space<vmem>>, vector<1x13xbf16>
    %cst_10 = arith.constant dense<0.000000e+00> : vector<1x128xf32>
    %9 = tpu.matmul %8, %4, %cst_10 {dimension_numbers = #tpu.dot_dimension_numbers<[1], [0], [0], [1], [0, 0, 1, 1], [], []>} : vector<1x13xbf16>, vector<13x128xbf16>, vector<1x128xf32> -> vector<1x128xf32>
    %cst_11 = arith.constant 0.000000e+00 : f32
    %10 = vector.broadcast %cst_11 : f32 to vector<1x10xf32>
    %cst_12 = arith.constant 0.000000e+00 : f32
    %11 = vector.broadcast %cst_12 : f32 to vector<1x10xf32>
    %c0_i32 = arith.constant 0 : i32
    %12 = arith.subi %0, %c0_i32 : i32
    %13 = arith.addi %c0_i32, %12 : i32
    %c1_i32 = arith.constant 1 : i32
    %14:2 = scf.for %arg5 = %c0_i32 to %13 step %c1_i32 iter_args(%arg6 = %10, %arg7 = %11) -> (vector<1x10xf32>, vector<1x10xf32>)  : i32 {
      %45 = arith.index_cast %arg5 : i32 to index
      %c0_23 = arith.constant 0 : index
      %46 = vector.load %arg4[%45, %c0_23] : memref<17x128xf32, #tpu.memory_space<vmem>>, vector<1x128xf32>
      %47 = arith.truncf %arg6 : vector<1x10xf32> to vector<1x10xbf16>
      %cst_24 = arith.constant dense<0.000000e+00> : vector<1x128xf32>
      %48 = tpu.matmul %47, %2, %cst_24 {dimension_numbers = #tpu.dot_dimension_numbers<[1], [0], [0], [1], [0, 0, 1, 1], [], []>} : vector<1x10xbf16>, vector<10x128xbf16>, vector<1x128xf32> -> vector<1x128xf32>
      %49 = arith.addf %46, %48 : vector<1x128xf32>
      %50 = arith.negf %49 : vector<1x128xf32>
      %51 = math.exp %50 : vector<1x128xf32>
      %cst_25 = arith.constant 1.000000e+00 : f32
      %52 = vector.broadcast %cst_25 : f32 to vector<1x128xf32>
      %53 = arith.addf %52, %51 : vector<1x128xf32>
      %54 = arith.divf %52, %53 : vector<1x128xf32>
      %55 = vector.extract_strided_slice %54 {offsets = [0, 0], sizes = [1, 10], strides = [1, 1]} : vector<1x128xf32> to vector<1x10xf32>
      %56 = vector.extract_strided_slice %54 {offsets = [0, 32], sizes = [1, 10], strides = [1, 1]} : vector<1x128xf32> to vector<1x10xf32>
      %57 = vector.extract_strided_slice %54 {offsets = [0, 64], sizes = [1, 10], strides = [1, 1]} : vector<1x128xf32> to vector<1x10xf32>
      %cst_26 = arith.constant 2.000000e+00 : f32
      %58 = vector.broadcast %cst_26 : f32 to vector<1x10xf32>
      %59 = arith.mulf %58, %57 : vector<1x10xf32>
      %cst_27 = arith.constant 1.000000e+00 : f32
      %60 = vector.broadcast %cst_27 : f32 to vector<1x10xf32>
      %61 = arith.subf %59, %60 : vector<1x10xf32>
      %62 = vector.extract_strided_slice %54 {offsets = [0, 96], sizes = [1, 10], strides = [1, 1]} : vector<1x128xf32> to vector<1x10xf32>
      %63 = arith.mulf %56, %arg7 : vector<1x10xf32>
      %64 = arith.mulf %55, %61 : vector<1x10xf32>
      %65 = arith.addf %63, %64 : vector<1x10xf32>
      %66 = math.tanh %65 : vector<1x10xf32>
      %67 = arith.mulf %62, %66 : vector<1x10xf32>
      scf.yield %67, %65 : vector<1x10xf32>, vector<1x10xf32>
    }
    %15 = arith.truncf %14#0 : vector<1x10xf32> to vector<1x10xbf16>
    %cst_13 = arith.constant dense<0.000000e+00> : vector<1x128xf32>
    %16 = tpu.matmul %15, %3, %cst_13 {dimension_numbers = #tpu.dot_dimension_numbers<[1], [0], [0], [1], [0, 0, 1, 1], [], []>} : vector<1x10xbf16>, vector<10x128xbf16>, vector<1x128xf32> -> vector<1x128xf32>
    %17 = arith.addf %16, %9 : vector<1x128xf32>
    %18 = tpu.iota {dimensions = array<i32: 1>} : vector<1x128xi32>
    %c48_i32 = arith.constant 48 : i32
    %19 = vector.broadcast %c48_i32 : i32 to vector<1x128xi32>
    %20 = arith.cmpi eq, %18, %19 : vector<1x128xi32>
    %21 = arith.negf %17 : vector<1x128xf32>
    %22 = math.exp %21 : vector<1x128xf32>
    %cst_14 = arith.constant 1.000000e+00 : f32
    %23 = vector.broadcast %cst_14 : f32 to vector<1x128xf32>
    %24 = arith.addf %23, %22 : vector<1x128xf32>
    %25 = arith.divf %23, %24 : vector<1x128xf32>
    %26 = arith.select %20, %25, %17 : vector<1x128xi1>, vector<1x128xf32>
    %27 = vector.extract_strided_slice %17 {offsets = [0, 49], sizes = [1, 3], strides = [1, 1]} : vector<1x128xf32> to vector<1x3xf32>
    %cst_15 = arith.constant dense<0.000000e+00> : vector<3x128xf32>
    %28 = tpu.matmul %27, %17, %cst_15 {dimension_numbers = #tpu.dot_dimension_numbers<[0], [0], [1], [1], [0, 1, 1, 1], [], []>} : vector<1x3xf32>, vector<1x128xf32>, vector<3x128xf32> -> vector<3x128xf32>
    %29 = tpu.iota {dimensions = array<i32: 1>} : vector<3x128xi32>
    %c48_i32_16 = arith.constant 48 : i32
    %30 = vector.broadcast %c48_i32_16 : i32 to vector<3x128xi32>
    %31 = arith.cmpi slt, %29, %30 : vector<3x128xi32>
    %cst_17 = arith.constant 0x7F800000 : f32
    %32 = vector.broadcast %cst_17 : f32 to vector<3x128xf32>
    %33 = arith.select %31, %28, %32 : vector<3x128xi1>, vector<3x128xf32>
    %34 = vector.shape_cast %33 : vector<3x128xf32> to vector<1x3x128xf32>
    %cst_18 = arith.constant dense<0x7F800000> : vector<1xf32>
    %35 = vector.multi_reduction <minimumf>, %34, %cst_18 [1, 2] : vector<1x3x128xf32> to vector<1xf32>
    %36 = vector.shape_cast %35 : vector<1xf32> to vector<1x1x1xf32>
    %37 = vector.extract %36[0, 0, 0] : f32 from vector<1x1x1xf32>
    %38 = vector.broadcast %37 : f32 to vector<3x128xf32>
    %39 = arith.subf %28, %38 : vector<3x128xf32>
    %cst_19 = arith.constant 0.000000e+00 : f32
    %40 = vector.broadcast %cst_19 : f32 to vector<3x128xf32>
    %41 = arith.select %31, %39, %40 : vector<3x128xi1>, vector<3x128xf32>
    %cst_20 = arith.constant 0.000000e+00 : f32
    %42 = vector.broadcast %cst_20 : f32 to vector<4x128xf32>
    %43 = tpu.concatenate %26, %41, %42 in 0 : vector<1x128xf32>, vector<3x128xf32>, vector<4x128xf32> -> vector<8x128xf32>
    %c0_21 = arith.constant 0 : index
    %c0_22 = arith.constant 0 : index
    %44 = vector.load %arg3[%c0_21, %c0_22] : memref<8x128xf32, #tpu.memory_space<vmem>>, vector<8x128xf32>
    tpu.vector_store %arg3[%c0_21, %c0_22], %43 {strides = array<i32>} : memref<8x128xf32, #tpu.memory_space<vmem>>, vector<8x128xf32>,
    return
  }
}

</mosaic_0001>

<llo_original>
// kernel: _forward_jit.1
$region0: #{_forward_jit.1}
  #allocation0 [shape = 'u32[]', space=smem, size = 0x4, offset = 0x4, fixed_abs, tag = 'smem constant byte address 0x4 - core index']
  #allocation1 [shape = 'u32[144,128]{1,0:T(1,128)}', space=vmem, size = 0x12000, scoped, tag = 'internal scratch']
  #allocation2 [shape = 'f32[17,128]{1,0:T(8,128)}', space=vmem, size = 0x3000, scoped, tag = 'scratch operand']
  #allocation3 [shape = 's32[1]{0:T(128)S(6)}', space=smem, size = 0x200, scoped, tag = 'scoped memory for _forward_jit.1']
  %s0 = inlined_call_operand.<no memory space> [shape: s32[1], index: 0, kind: input, shape index: {}]
  %s1 = inlined_call_operand.vmem [shape: bf16[17,32], index: 1, kind: input, shape index: {}]
  %s2 = inlined_call_operand.vmem [shape: bf16[80,128], index: 2, kind: input, shape index: {}]
  %s3 = inlined_call_operand.hbm [shape: f32[8,128], index: 3, kind: output, shape index: {}]
  %s4 = sld [smem:[#allocation0]]
  $region29: #{_forward_jit.1} parent=0
    _
  %s6 = ssub.s32 1, %s4
  %s7 = scalar_select 0, %s6, %s4
  %8 = sst [smem:[#allocation3]] %s0
  $region1: #{_forward_jit.1} parent=0
    #allocation4 [shape = 'u8[4096]{0}', space=vmem, size = 0x1000, scoped, tag = 'output window, operand 0, single buffered']
    #allocation5 [shape = 's32[1]{0}', space=sflag, size = 0x4, scoped, tag = 'scoped memory for _forward_jit.1']
    %9 = vsyncpa [#allocation5], 0
    // Predicated region
    $region2: #{_forward_jit.1} parent=1 // pred_check
      _
    $region3: #{_forward_jit.1} parent=1 // pred_check_branch
      %11 = sbr.rel (0) target = $region5
    $region4: #{_forward_jit.1} parent=1 // pred_region
      _
    $region5: #{_forward_jit.1} parent=1 // pred_fallthru
      _
    // Predicated region
    $region6: #{_forward_jit.1} parent=1 // pred_check
      _
    $region7: #{_forward_jit.1} parent=1 // pred_check_branch
      %13 = sbr.rel (0) target = $region9
    $region8: #{_forward_jit.1} parent=1 // pred_region
      _
    $region9: #{_forward_jit.1} parent=1 // pred_fallthru
      _
    // Predicated region
    $region10: #{_forward_jit.1} parent=1 // pred_check
      _
    $region11: #{_forward_jit.1} parent=1 // pred_check_branch
      %15 = sbr.rel (0) target = $region13
    $region12: #{_forward_jit.1} parent=1 // pred_region
      _
    $region13: #{_forward_jit.1} parent=1 // pred_fallthru
      _
    %s17 = sld [smem:[#allocation3]]
    %v18 = vld [vmem:[%s2] sm:$0xf]
    %v19 = vld [vmem:[%s2 + $0x4] sm:$0xf]
    %v20 = vld [vmem:[%s2 + $0x8] sm:$0xf]
    %v21 = vld [vmem:[%s2 + $0xc] sm:$0xf]
    %v22 = vld [vmem:[%s2 + $0x10] sm:$0xf]
    %v23 = vld [vmem:[%s2 + $0x14] sm:$0x1]
    %v24 = vld [vmem:[%s2 + $0x18] sm:$0xf]
    %v25 = vld [vmem:[%s2 + $0x1c] sm:$0x1]
    %v26 = vld [vmem:[%s2 + $0x20] sm:$0xf]
    %v27 = vld [vmem:[%s2 + $0x24] sm:$0x7]
    %v28 = vld [vmem:[%s1] sm:$0xf]
    %v29 = vld [vmem:[%s1 + $0x4] sm:$0xf]
    %v30 = vld [vmem:[%s1 + $0x8] sm:$0x1]
    %v34 = vunpack.c.l.b16 %v28
    %v35 = vunpack.c.l.b16 %v29
    %v36 = vunpack.c.l.b16 %v30
    %v37 = vpack.c.b16 %v35, %v34
    %v38 = vpack.c.b16 %v36, %v36
    %v43 = vunpack.c.l.b16 %v18
    %v44 = vunpack.c.l.b16 %v19
    %v45 = vunpack.c.l.b16 %v20
    %v46 = vunpack.c.l.b16 %v21
    %v47 = vpack.c.b16 %v44, %v43
    %v48 = vpack.c.b16 %v46, %v45
    %vm51 = vcmask 261120
    %v53 = vsel %vm51, %v37, 0
    %v56 = vsel %vm51, %v38, 0
    %58 = vmatprep.subr.bf16.mxu0 0
    %59 = vmatpush1.bf16.msra.mxu0 0
    %60 = vmatprep.subr.bf16.mxu0 0
    %61 = vmatpush1.bf16.msra.mxu0 0
    %62 = vmatprep.subr.bf16.mxu0 0
    %63 = vmatpush1.bf16.msra.mxu0 0
    %64 = vmatprep.subr.bf16.mxu0 0
    %65 = vmatpush1.bf16.msra.mxu0 0
    %66 = vmatprep.subr.bf16.mxu0 0
    %67 = vmatpush1.bf16.msra.mxu0 0
    %68 = vmatprep.subr.bf16.mxu0 0
    %69 = vmatpush1.bf16.msra.mxu0 0
    %70 = vmatprep.subr.bf16.mxu0 0
    %71 = vmatpush1.bf16.msra.mxu0 %v48
    %72 = vmatprep.subr.bf16.mxu0 0
    %73 = vmatpush1.bf16.msra.mxu0 %v47
    %74 = vmatprep.subr.bf16.mxu0 0
    %75 = vmatpush2.bf16.msra.mxu0 0
    %76 = vmatprep.subr.bf16.mxu0 0
    %77 = vmatpush2.bf16.msra.mxu0 0
    %78 = vmatprep.subr.bf16.mxu0 0
    %79 = vmatpush2.bf16.msra.mxu0 0
    %80 = vmatprep.subr.bf16.mxu0 0
    %81 = vmatpush2.bf16.msra.mxu0 0
    %82 = vmatprep.subr.bf16.mxu0 0
    %83 = vmatpush2.bf16.msra.mxu0 0
    %84 = vmatprep.subr.bf16.mxu0 0
    %85 = vmatpush2.bf16.msra.mxu0 0
    %86 = vmatprep.subr.bf16.mxu0 0
    %87 = vmatpush2.bf16.msra.mxu0 0
    %88 = vmatprep.subr.bf16.mxu0 0
    %89 = vmatpush2.bf16.msra.mxu0 0
    %90 = vmatprep.mubr.bf16.mxu0 0
    %91 = vmatmul.mubr.bf16.gmra.mxu0 %v53
    %v92 = vpop.f32.mrf.mxu0
    %v93 = vadd.f32 0.0, %v92
    %v94 = vpop.f32.mrf.mxu0
    %v95 = vpop.f32.mrf.mxu0
    %v96 = vadd.f32 0.0, %v95
    %v97 = vpop.f32.mrf.mxu0
    %98 = vmatprep.mubr.bf16.mxu0 0
    %99 = vmatmul.mubr.bf16.gmra.mxu0 %v56
    %v100 = vpop.f32.mrf.mxu0
    %v101 = vadd.f32 0.0, %v100
    %v102 = vpop.f32.mrf.mxu0
    %v103 = vpop.f32.mrf.mxu0
    %v104 = vpop.f32.mrf.mxu0
    %105 = vdwg.mxu0
    %106 = vst [vmem:[#allocation2] sm:$0xff] %v93
    %107 = vst [vmem:[#allocation2 + $0x8] sm:$0xff] %v96
    %108 = vst [vmem:[#allocation2 + $0x10] sm:$0x1] %v101
    %v109 = vld [vmem:[%s1 + $0x8] sm:$0x1]
    %v112 = vunpack.c.l.b16 %v26
    %v113 = vunpack.c.l.b16 %v27
    %v114 = vpack.c.b16 %v113, %v112
    %vm115 = vcmask 105472
    %v117 = vsel %vm115, %v109, 0
    %vm119 = vcmask 1045504
    %vm120 = vcmask 1046528
    %v121 = vsel %vm119, 4294967295, 65535
    %v122 = vsel %vm120, %v121, 0
    %v124 = vand.u32 %v114, %v122
    %126 = vmatprep.subr.bf16.mxu0 0
    %127 = vmatpush1.bf16.msra.mxu0 0
    %128 = vmatprep.subr.bf16.mxu0 0
    %129 = vmatpush1.bf16.msra.mxu0 0
    %130 = vmatprep.subr.bf16.mxu0 0
    %131 = vmatpush1.bf16.msra.mxu0 0
    %132 = vmatprep.subr.bf16.mxu0 0
    %133 = vmatpush1.bf16.msra.mxu0 0
    %134 = vmatprep.subr.bf16.mxu0 0
    %135 = vmatpush1.bf16.msra.mxu0 0
    %136 = vmatprep.subr.bf16.mxu0 0
    %137 = vmatpush1.bf16.msra.mxu0 0
    %138 = vmatprep.subr.bf16.mxu0 0
    %139 = vmatpush1.bf16.msra.mxu0 0
    %140 = vmatprep.subr.bf16.mxu0 0
    %141 = vmatpush1.bf16.msra.mxu0 %v124
    %142 = vmatprep.subr.bf16.mxu0 0
    %143 = vmatpush2.bf16.msra.mxu0 0
    %144 = vmatprep.subr.bf16.mxu0 0
    %145 = vmatpush2.bf16.msra.mxu0 0
    %146 = vmatprep.subr.bf16.mxu0 0
    %147 = vmatpush2.bf16.msra.mxu0 0
    %148 = vmatprep.subr.bf16.mxu0 0
    %149 = vmatpush2.bf16.msra.mxu0 0
    %150 = vmatprep.subr.bf16.mxu0 0
    %151 = vmatpush2.bf16.msra.mxu0 0
    %152 = vmatprep.subr.bf16.mxu0 0
    %153 = vmatpush2.bf16.msra.mxu0 0
    %154 = vmatprep.subr.bf16.mxu0 0
    %155 = vmatpush2.bf16.msra.mxu0 0
    %156 = vmatprep.subr.bf16.mxu0 0
    %157 = vmatpush2.bf16.msra.mxu0 0
    %158 = vmatprep.mubr.bf16.mxu0 0
    %159 = vmatmul.mubr.bf16.gmra.mxu0 %v117
    %v160 = vpop.f32.mrf.mxu0
    %v161 = vadd.f32 0.0, %v160
    %v162 = vpop.f32.mrf.mxu0
    %v163 = vpop.f32.mrf.mxu0
    %v164 = vpop.f32.mrf.mxu0
    %165 = vdwg.mxu0
    // While loop
    $region14: #{_forward_jit.1} parent=1 // loop_pre_header
      _
    $region15: #{_forward_jit.1} parent=1 // loop_header
      %s167 = sphi 0, %s169
      %p168 = scmp.ge.s32.totalorder %s167, %s17
      %v172 = vphi 0.0, %v258
      %v173 = vphi 0.0, %v252
    $region16: #{_forward_jit.1} parent=1 // loop_header_branch
      %171 = sbr.rel (%p168) target = $region20
    $region17: #{_forward_jit.1} parent=1 // loop_body
      %s174 = scalar_lea.vmem [#allocation2], %s167
      %v175 = vld [vmem:[%s174] sm:$0x1]
      %v176 = vpack.c.bf16 %v172, %v172
      %178 = vrot.lane.b32.xlu0 %v176, 32
      %v179 = vpop.permute.xlu0 %178
      %v182 = vunpack.c.l.b16 %v22
      %v183 = vunpack.c.l.b16 %v23
      %v184 = vpack.c.b16 %v183, %v182
      %vm185 = vcmask 80896
      %v187 = vsel %vm185, %v179, 0
      %vm189 = vcmask 1044480
      %v191 = vsel %vm189, %v184, 0
      %193 = vmatprep.subr.bf16.mxu0 0
      %194 = vmatpush1.bf16.msra.mxu0 0
      %195 = vmatprep.subr.bf16.mxu0 0
      %196 = vmatpush1.bf16.msra.mxu0 0
      %197 = vmatprep.subr.bf16.mxu0 0
      %198 = vmatpush1.bf16.msra.mxu0 0
      %199 = vmatprep.subr.bf16.mxu0 0
      %200 = vmatpush1.bf16.msra.mxu0 0
      %201 = vmatprep.subr.bf16.mxu0 0
      %202 = vmatpush1.bf16.msra.mxu0 0
      %203 = vmatprep.subr.bf16.mxu0 0
      %204 = vmatpush1.bf16.msra.mxu0 0
      %205 = vmatprep.subr.bf16.mxu0 0
      %206 = vmatpush1.bf16.msra.mxu0 0
      %207 = vmatprep.subr.bf16.mxu0 0
      %208 = vmatpush1.bf16.msra.mxu0 %v191
      %209 = vmatprep.subr.bf16.mxu0 0
      %210 = vmatpush2.bf16.msra.mxu0 0
      %211 = vmatprep.subr.bf16.mxu0 0
      %212 = vmatpush2.bf16.msra.mxu0 0
      %213 = vmatprep.subr.bf16.mxu0 0
      %214 = vmatpush2.bf16.msra.mxu0 0
      %215 = vmatprep.subr.bf16.mxu0 0
      %216 = vmatpush2.bf16.msra.mxu0 0
      %217 = vmatprep.subr.bf16.mxu0 0
      %218 = vmatpush2.bf16.msra.mxu0 0
      %219 = vmatprep.subr.bf16.mxu0 0
      %220 = vmatpush2.bf16.msra.mxu0 0
      %221 = vmatprep.subr.bf16.mxu0 0
      %222 = vmatpush2.bf16.msra.mxu0 0
      %223 = vmatprep.subr.bf16.mxu0 0
      %224 = vmatpush2.bf16.msra.mxu0 0
      %225 = vmatprep.mubr.bf16.mxu0 0
      %226 = vmatmul.mubr.bf16.gmra.mxu0 %v187
      %v227 = vpop.f32.mrf.mxu0
      %v228 = vadd.f32 0.0, %v227
      %v229 = vpop.f32.mrf.mxu0
      %v230 = vpop.f32.mrf.mxu0
      %v231 = vpop.f32.mrf.mxu0
      %232 = vdwg.mxu0
      %v233 = vadd.f32 %v175, %v228
      %v234 = vxor.u32 %v233, 2147483648
      %v235 = vmul.f32 %v234, 1.442695
      %v236 = vpow.pop %v235
      %v237 = vadd.f32 %v236, 1.0
      %v238 = vrcp.pop %v237
      %v239 = vmul.f32 1.0, %v238
      %v240 = vmul.f32 %v239, 2.0
      %v241 = vsub.f32 %v240, 1.0
      %v242 = vmul.f32 %v239, %v173
      %244 = vrot.lane.b32.xlu0 %v241, 64
      %v245 = vpop.permute.xlu0 %244
      %v247 = vmul.f32 %v239, %v245
      %249 = vrot.lane.b32.xlu0 %v247, 32
      %v250 = vpop.permute.xlu0 %249
      %v252 = vadd.f32 %v242, %v250
      %v253 = vtanh.pop %v252
      %255 = vrot.lane.b32.xlu0 %v253, 64
      %v256 = vpop.permute.xlu0 %255
      %v258 = vmul.f32 %v239, %v256
    $region18: #{_forward_jit.1} parent=1 // loop_footer
      %s169 = sadd.s32 %s167, 1
    $region19: #{_forward_jit.1} parent=1 // loop_footer_branch
      %166 = sbr.rel target = $region15
    $region20: #{_forward_jit.1} parent=1 // loop_exit
      _
    %v259 = vpack.c.bf16 %v172, %v172
    %261 = vrot.lane.b32.xlu0 %v259, 32
    %v262 = vpop.permute.xlu0 %261
    %v265 = vunpack.c.l.b16 %v24
    %v266 = vunpack.c.l.b16 %v25
    %v267 = vpack.c.b16 %v266, %v265
    %vm268 = vcmask 80896
    %v270 = vsel %vm268, %v262, 0
    %vm272 = vcmask 1044480
    %v274 = vsel %vm272, %v267, 0
    %276 = vmatprep.subr.bf16.mxu0 0
    %277 = vmatpush1.bf16.msra.mxu0 0
    %278 = vmatprep.subr.bf16.mxu0 0
    %279 = vmatpush1.bf16.msra.mxu0 0
    %280 = vmatprep.subr.bf16.mxu0 0
    %281 = vmatpush1.bf16.msra.mxu0 0
    %282 = vmatprep.subr.bf16.mxu0 0
    %283 = vmatpush1.bf16.msra.mxu0 0
    %284 = vmatprep.subr.bf16.mxu0 0
    %285 = vmatpush1.bf16.msra.mxu0 0
    %286 = vmatprep.subr.bf16.mxu0 0
    %287 = vmatpush1.bf16.msra.mxu0 0
    %288 = vmatprep.subr.bf16.mxu0 0
    %289 = vmatpush1.bf16.msra.mxu0 0
    %290 = vmatprep.subr.bf16.mxu0 0
    %291 = vmatpush1.bf16.msra.mxu0 %v274
    %292 = vmatprep.subr.bf16.mxu0 0
    %293 = vmatpush2.bf16.msra.mxu0 0
    %294 = vmatprep.subr.bf16.mxu0 0
    %295 = vmatpush2.bf16.msra.mxu0 0
    %296 = vmatprep.subr.bf16.mxu0 0
    %297 = vmatpush2.bf16.msra.mxu0 0
    %298 = vmatprep.subr.bf16.mxu0 0
    %299 = vmatpush2.bf16.msra.mxu0 0
    %300 = vmatprep.subr.bf16.mxu0 0
    %301 = vmatpush2.bf16.msra.mxu0 0
    %302 = vmatprep.subr.bf16.mxu0 0
    %303 = vmatpush2.bf16.msra.mxu0 0
    %304 = vmatprep.subr.bf16.mxu0 0
    %305 = vmatpush2.bf16.msra.mxu0 0
    %306 = vmatprep.subr.bf16.mxu0 0
    %307 = vmatpush2.bf16.msra.mxu0 0
    %308 = vmatprep.mubr.bf16.mxu0 0
    %309 = vmatmul.mubr.bf16.gmra.mxu0 %v270
    %v310 = vpop.f32.mrf.mxu0
    %v311 = vadd.f32 %v161, %v310
    %v312 = vpop.f32.mrf.mxu0
    %v313 = vpop.f32.mrf.mxu0
    %v314 = vpop.f32.mrf.mxu0
    %315 = vdwg.mxu0
    %v316 = vlaneseq
    %v317 = vand.u32 %v316, 127
    %vm318 = vcmp.eq.s32.totalorder %v317, 48
    %v319 = vxor.u32 %v311, 2147483648
    %v320 = vmul.f32 %v319, 1.442695
    %v321 = vpow.pop %v320
    %v322 = vadd.f32 %v321, 1.0
    %v323 = vrcp.pop %v322
    %v324 = vmul.f32 1.0, %v323
    %v325 = vsel %vm318, %v324, %v311
    %327 = vrot.lane.b32.xlu0 %v311, 79
    %v328 = vpop.permute.xlu0 %327
    %330 = vxpose.xlu0.b32.start [1/16] %v328, 128
    %331 = vxpose.xlu0.b32.cont [2/16] 0.0, 128
    %332 = vxpose.xlu0.b32.cont [3/16] 0.0, 128
    %333 = vxpose.xlu0.b32.cont [4/16] 0.0, 128
    %334 = vxpose.xlu0.b32.cont [5/16] 0.0, 128
    %335 = vxpose.xlu0.b32.cont [6/16] 0.0, 128
    %336 = vxpose.xlu0.b32.cont [7/16] 0.0, 128
    %337 = vxpose.xlu0.b32.cont [8/16] 0.0, 128
    %338 = vxpose.xlu0.b32.cont [9/16] 0.0, 128
    %339 = vxpose.xlu0.b32.cont [10/16] 0.0, 128
    %340 = vxpose.xlu0.b32.cont [11/16] 0.0, 128
    %341 = vxpose.xlu0.b32.cont [12/16] 0.0, 128
    %342 = vxpose.xlu0.b32.cont [13/16] 0.0, 128
    %343 = vxpose.xlu0.b32.cont [14/16] 0.0, 128
    %344 = vxpose.xlu0.b32.cont [15/16] 0.0, 128
    %345 = vxpose.xlu0.b32.end [16/16] 0.0, 128
    %v346 = vpop.trf.xlu0
    %v347 = vpop.trf.xlu0
    %v348 = vpop.trf.xlu0
    %v349 = vpop.trf.xlu0
    %v350 = vpop.trf.xlu0
    %v351 = vpop.trf.xlu0
    %v352 = vpop.trf.xlu0
    %v353 = vpop.trf.xlu0
    %v354 = vpop.trf.xlu0
    %v355 = vpop.trf.xlu0
    %v356 = vpop.trf.xlu0
    %v357 = vpop.trf.xlu0
    %v358 = vpop.trf.xlu0
    %v359 = vpop.trf.xlu0
    %v360 = vpop.trf.xlu0
    %v361 = vpop.trf.xlu0
    %vm362 = vcmask 7168
    %v364 = vsel %vm362, %v346, 0
    %vm366 = vcmask 1040384
    %v367 = vsel %vm366, %v311, 0
    %369 = vmatprep.subr.mxu0 0.0
    %370 = vmatpush1.msra.mxu0 0.0
    %371 = vmatprep.subr.mxu0 0.0
    %372 = vmatpush1.msra.mxu0 0.0
    %373 = vmatprep.subr.mxu0 0.0
    %374 = vmatpush1.msra.mxu0 0.0
    %375 = vmatprep.subr.mxu0 0.0
    %376 = vmatpush1.msra.mxu0 0.0
    %377 = vmatprep.subr.mxu0 0.0
    %378 = vmatpush1.msra.mxu0 0.0
    %379 = vmatprep.subr.mxu0 0.0
    %380 = vmatpush1.msra.mxu0 0.0
    %381 = vmatprep.subr.mxu0 0.0
    %382 = vmatpush1.msra.mxu0 0.0
    %383 = vmatprep.subr.mxu0 0.0
    %384 = vmatpush1.msra.mxu0 0.0
    %385 = vmatprep.subr.mxu0 0.0
    %386 = vmatpush1.msra.mxu0 0.0
    %387 = vmatprep.subr.mxu0 0.0
    %388 = vmatpush1.msra.mxu0 0.0
    %389 = vmatprep.subr.mxu0 0.0
    %390 = vmatpush1.msra.mxu0 0.0
    %391 = vmatprep.subr.mxu0 0.0
    %392 = vmatpush1.msra.mxu0 0.0
    %393 = vmatprep.subr.mxu0 0.0
    %394 = vmatpush1.msra.mxu0 0.0
    %395 = vmatprep.subr.mxu0 0.0
    %396 = vmatpush1.msra.mxu0 0.0
    %397 = vmatprep.subr.mxu0 0.0
    %398 = vmatpush1.msra.mxu0 0.0
    %399 = vmatprep.subr.mxu0 0.0
    %400 = vmatpush1.msra.mxu0 %v367
    %401 = vmatprep.subr.mxu0 0.0
    %402 = vmatpush2.msra.mxu0 0.0
    %403 = vmatprep.subr.mxu0 0.0
    %404 = vmatpush2.msra.mxu0 0.0
    %405 = vmatprep.subr.mxu0 0.0
    %406 = vmatpush2.msra.mxu0 0.0
    %407 = vmatprep.subr.mxu0 0.0
    %408 = vmatpush2.msra.mxu0 0.0
    %409 = vmatprep.subr.mxu0 0.0
    %410 = vmatpush2.msra.mxu0 0.0
    %411 = vmatprep.subr.mxu0 0.0
    %412 = vmatpush2.msra.mxu0 0.0
    %413 = vmatprep.subr.mxu0 0.0
    %414 = vmatpush2.msra.mxu0 0.0
    %415 = vmatprep.subr.mxu0 0.0
    %416 = vmatpush2.msra.mxu0 0.0
    %417 = vmatprep.subr.mxu0 0.0
    %418 = vmatpush2.msra.mxu0 0.0
    %419 = vmatprep.subr.mxu0 0.0
    %420 = vmatpush2.msra.mxu0 0.0
    %421 = vmatprep.subr.mxu0 0.0
    %422 = vmatpush2.msra.mxu0 0.0
    %423 = vmatprep.subr.mxu0 0.0
    %424 = vmatpush2.msra.mxu0 0.0
    %425 = vmatprep.subr.mxu0 0.0
    %426 = vmatpush2.msra.mxu0 0.0
    %427 = vmatprep.subr.mxu0 0.0
    %428 = vmatpush2.msra.mxu0 0.0
    %429 = vmatprep.subr.mxu0 0.0
    %430 = vmatpush2.msra.mxu0 0.0
    %431 = vmatprep.subr.mxu0 0.0
    %432 = vmatpush2.msra.mxu0 0.0
    %433 = vmatprep.mubr.f32.mxu0 0.0
    %434 = vmatmul.mubr.f32.gmra.mxu0 %v364
    %v435 = vpop.f32.mrf.mxu0
    %v436 = vadd.f32 0.0, %v435
    %v437 = vpop.f32.mrf.mxu0
    %438 = vdwg.mxu0
    %vm439 = vcmp.lt.s32.totalorder %v317, 48
    %v440 = vsel %vm439, %v436, inf
    %vm441 = vcmask 1042432
    %v442 = vsel %vm441, %v440, inf
    %443 = vmin.xlane.f32.xlu0 %v442
    %v444 = vpop.xlane.xlu0 %443
    %v445 = vrot.slane %v444, 4
    %v446 = vmin.f32 %v444, %v445
    %v447 = vrot.slane %v446, 2
    %v448 = vmin.f32 %v446, %v447
    %v449 = vrot.slane %v448, 1
    %v450 = vmin.f32 %v448, %v449
    %s451 = vtos %v450
    %v452 = vstv %s451
    %v453 = vsub.f32 %v436, %v452
    %v454 = vsel %vm439, %v453, 0.0
    %v456 = vrot.slane %v454, 7
    %v458 = vsel %vm366, %v325, %v456
    %vm459 = vcmask 1043456
    %v460 = vsel %vm459, %v458, 0.0
    %461 = vst [vmem:[#allocation4] sm:$0xff] %v460
    // Predicated region
    $region21: #{_forward_jit.1} parent=1 // pred_check
      _
    $region22: #{_forward_jit.1} parent=1 // pred_check_branch
      %463 = sbr.rel (0) target = $region24
    $region23: #{_forward_jit.1} parent=1 // pred_region
      %s465 = ssub.s32 128, 128
      %466 = vsyncadd [#allocation5], %s465
      %s468 = sshll.u32 [#allocation4], 4
      %s469 = int_to_ptr.vmem [resolvable:$true] %s468
      %471 = dma.vmem_to_hbm [thread:$0]  %s469, 128, %s3, [#allocation5]
    $region24: #{_forward_jit.1} parent=1 // pred_fallthru
      _
    // Predicated region
    $region25: #{_forward_jit.1} parent=1 // pred_check
      _
    $region26: #{_forward_jit.1} parent=1 // pred_check_branch
      %473 = sbr.rel (0) target = $region28
    $region27: #{_forward_jit.1} parent=1 // pred_region
      %474 = dma.done [#allocation5], 128
    $region28: #{_forward_jit.1} parent=1 // pred_fallthru
      _
    %475 = vsyncpa [#allocation5], 1

</llo_original>
